<compile_context>
chip_gen: v7x
topology: tpu7x:2x2x1
jax: 0.10.0
libtpu: 0.0.40
codegen_flags: <defaults>
</compile_context>

<pallas_src>
import jax
import jax.numpy as jnp
from jax.experimental import pallas as pl
from jax.experimental.pallas import tpu as pltpu

KH = KW = 3  # 3x3 conv, stride=1, pad=1 (SAME)


def _conv_relu_kernel(x_ref, m_ref, b_ref, o_ref, xpad_ref):
    # x_ref   : (N, H, W*Cin)        lane-friendly input slab (no padding)
    # m_ref   : (KH, W*Cin, W*Cout)  Toeplitz-expanded weights (one mat per kh)
    # b_ref   : (1, W*Cout)          bias replicated across the w part of lane
    # o_ref   : (N, H, W*Cout)       lane-dense output slab
    # xpad_ref: (H+2, W*Cin)         VMEM scratch; rows 0 and H+1 stay zero
    N = x_ref.shape[0]
    H = x_ref.shape[1]

    # Zero once; only the interior rows [1, H] are overwritten per image, so
    # the top/bottom zero rows provide the SAME row padding for every image.
    xpad_ref[...] = jnp.zeros_like(xpad_ref)
    bias_row = b_ref[...]                      # (1, W*Cout)

    for n in range(N):                         # N is tiny (2): static unroll
        xpad_ref[1:H + 1, :] = x_ref[n]        # copy un-padded rows into interior
        xp = xpad_ref[...]                     # (H+2, W*Cin)

        # Three dense MXU matmuls (K=64, N_lanes=128), f32 accumulation.
        acc = jnp.dot(xp[0:H, :], m_ref[0],
                      preferred_element_type=jnp.float32)
        acc = acc + jnp.dot(xp[1:H + 1, :], m_ref[1],
                            preferred_element_type=jnp.float32)
        acc = acc + jnp.dot(xp[2:H + 2, :], m_ref[2],
                            preferred_element_type=jnp.float32)

        acc = jnp.maximum(acc + bias_row, 0.0)  # bias + ReLU
        o_ref[n] = acc.astype(o_ref.dtype)      # full-lane (16, 128) store


def conv2d_relu_pallas(x_nchw, w_oihw, bias):
    """Conv2d(3x3, stride=1, pad=1) + ReLU.  x: NCHW, w: (Cout, Cin, 3, 3)."""
    N, Cin, H, W = x_nchw.shape
    Cout = w_oihw.shape[0]

    # ---- layout plumbing (tiny tensors; fused by XLA under jit) ----
    # Input slab (N, H, W*Cin): lane index = w*Cin + ci.
    x_slab = jnp.transpose(x_nchw, (0, 2, 3, 1)).reshape(N, H, W * Cin)

    # Toeplitz ("lowered") weights, one (W*Cin, W*Cout) matrix per kh:
    #   M[kh, w_in*Cin + ci, w*Cout + co] = Wt[kh, w_in - w + 1, ci, co]
    # and zero whenever (w_in - w + 1) falls outside [0, KW)  -> this encodes
    # both the kw shift and the SAME column padding.
    w_hwio = jnp.transpose(w_oihw, (2, 3, 1, 0)).astype(jnp.float32)  # (KH,KW,Cin,Cout)
    kw_idx = jnp.arange(W)[:, None] - jnp.arange(W)[None, :] + 1      # (W_in, W_out)
    valid = (kw_idx >= 0) & (kw_idx < KW)
    gathered = w_hwio[:, jnp.clip(kw_idx, 0, KW - 1), :, :]           # (KH,W,W,Cin,Cout)
    gathered = jnp.where(valid[None, :, :, None, None], gathered, 0.0)
    m_mats = jnp.transpose(gathered, (0, 1, 3, 2, 4)).reshape(KH, W * Cin, W * Cout)

    # Bias per (w, co) lane: lane index w*Cout + co -> bias[co].
    b_lane = jnp.tile(bias.astype(jnp.float32), W).reshape(1, W * Cout)

    out_slab = pl.pallas_call(
        _conv_relu_kernel,
        out_shape=jax.ShapeDtypeStruct((N, H, W * Cout), x_nchw.dtype),
        grid=(1,),  # single step: whole batch + weights fit trivially in VMEM
        in_specs=[
            pl.BlockSpec((N, H, W * Cin), lambda i: (0, 0, 0)),
            pl.BlockSpec((KH, W * Cin, W * Cout), lambda i: (0, 0, 0)),
            pl.BlockSpec((1, W * Cout), lambda i: (0, 0)),
        ],
        out_specs=pl.BlockSpec((N, H, W * Cout), lambda i: (0, 0, 0)),
        scratch_shapes=[pltpu.VMEM((H + 2, W * Cin), jnp.float32)],
        compiler_params=pltpu.CompilerParams(
            dimension_semantics=("arbitrary",)),
    )(x_slab, m_mats, b_lane)

    # Lane-dense (N, H, W*Cout) -> NCHW for the PyTorch-style module boundary.
    return jnp.transpose(out_slab.reshape(N, H, W, Cout), (0, 3, 1, 2))


def dist_module_forward(x_nchw, params):
    """DistModule.forward(*inputs) == wrapped module forward."""
    return conv2d_relu_pallas(x_nchw, params["weight"], params["bias"])


def _reference(x_nchw, params):
    x_nhwc = jnp.transpose(x_nchw, (0, 2, 3, 1))
    w_hwio = jnp.transpose(params["weight"], (2, 3, 1, 0))
    y = jax.lax.conv_general_dilated(
        x_nhwc, w_hwio, window_strides=(1, 1), padding="SAME",
        dimension_numbers=("NHWC", "HWIO", "NHWC"))
    y = y + params["bias"][None, None, None, :]
    y = jnp.maximum(y, 0.0)
    return jnp.transpose(y, (0, 3, 1, 2))


if __name__ == "__main__":
    key = jax.random.PRNGKey(0)
    kx, kw_, kb = jax.random.split(key, 3)

    N, Cin, H, W = 2, 4, 16, 16
    Cout = 8

    x = jax.random.normal(kx, (N, Cin, H, W), dtype=jnp.float32)
    # Deterministic parameter init (kaiming-uniform-like bound, like nn.Conv2d)
    fan_in = Cin * KH * KW
    bound = 1.0 / (fan_in ** 0.5)
    weight = jax.random.uniform(kw_, (Cout, Cin, KH, KW),
                                minval=-bound, maxval=bound, dtype=jnp.float32)
    bias = jax.random.uniform(kb, (Cout,),
                              minval=-bound, maxval=bound, dtype=jnp.float32)
    params = {"weight": weight, "bias": bias}

    fwd = jax.jit(dist_module_forward)
    out = jax.block_until_ready(fwd(x, params))

    ref = _reference(x, params)
    assert out.shape == (N, Cout, H, W)
    assert jnp.allclose(out, ref, atol=1e-4, rtol=1e-4)

    print("KERNEL_OK")
</pallas_src>

<mosaic_0001>
module attributes {stable_mosaic.version = 11 : i64} {
  func.func @_conv_relu_kernel(%arg0: i32, %arg1: memref<2x16x64xf32, #tpu.memory_space<vmem>>, %arg2: memref<3x64x128xf32, #tpu.memory_space<vmem>>, %arg3: memref<1x128xf32, #tpu.memory_space<vmem>>, %arg4: memref<2x16x128xf32, #tpu.memory_space<vmem>>, %arg5: memref<18x64xf32, #tpu.memory_space<vmem>>) attributes {dimension_semantics = [#tpu.dimension_semantics<arbitrary>], iteration_bounds = array<i64: 1>, scalar_prefetch = 0 : i64, scratch_operands = 1 : i64, tpu.core_type = #tpu.core_type<tc>, window_params = [{pipeline_mode = #tpu.pipeline_mode<synchronous>, transform_indices = @transform_0, window_bounds = array<i64: 2, 16, 64>}, {pipeline_mode = #tpu.pipeline_mode<synchronous>, transform_indices = @transform_1, window_bounds = array<i64: 3, 64, 128>}, {pipeline_mode = #tpu.pipeline_mode<synchronous>, transform_indices = @transform_2, window_bounds = array<i64: 1, 128>}, {pipeline_mode = #tpu.pipeline_mode<synchronous>, transform_indices = @transform_3, window_bounds = array<i64: 2, 16, 128>}]} {
    %cst = arith.constant 0.000000e+00 : f32
    %0 = vector.broadcast %cst : f32 to vector<18x64xf32>
    %c0 = arith.constant 0 : index
    %c0_0 = arith.constant 0 : index
    %1 = vector.load %arg5[%c0, %c0_0] : memref<18x64xf32, #tpu.memory_space<vmem>>, vector<18x64xf32>
    tpu.vector_store %arg5[%c0, %c0_0], %0 {strides = array<i32>} : memref<18x64xf32, #tpu.memory_space<vmem>>, vector<18x64xf32>,
    %c0_1 = arith.constant 0 : index
    %c0_2 = arith.constant 0 : index
    %2 = vector.load %arg3[%c0_1, %c0_2] : memref<1x128xf32, #tpu.memory_space<vmem>>, vector<1x128xf32>
    %c0_3 = arith.constant 0 : index
    %c0_4 = arith.constant 0 : index
    %c0_5 = arith.constant 0 : index
    %3 = vector.load %arg1[%c0_3, %c0_4, %c0_5] : memref<2x16x64xf32, #tpu.memory_space<vmem>>, vector<1x16x64xf32>
    %4 = vector.shape_cast %3 : vector<1x16x64xf32> to vector<16x64xf32>
    %c1 = arith.constant 1 : index
    %c0_6 = arith.constant 0 : index
    %5 = vector.load %arg5[%c1, %c0_6] : memref<18x64xf32, #tpu.memory_space<vmem>>, vector<16x64xf32>
    tpu.vector_store %arg5[%c1, %c0_6], %4 {strides = array<i32>} : memref<18x64xf32, #tpu.memory_space<vmem>>, vector<16x64xf32>,
    %c0_7 = arith.constant 0 : index
    %c0_8 = arith.constant 0 : index
    %6 = vector.load %arg5[%c0_7, %c0_8] : memref<18x64xf32, #tpu.memory_space<vmem>>, vector<18x64xf32>
    %7 = vector.extract_strided_slice %6 {offsets = [0, 0], sizes = [16, 64], strides = [1, 1]} : vector<18x64xf32> to vector<16x64xf32>
    %c0_9 = arith.constant 0 : index
    %c0_10 = arith.constant 0 : index
    %c0_11 = arith.constant 0 : index
    %8 = vector.load %arg2[%c0_9, %c0_10, %c0_11] : memref<3x64x128xf32, #tpu.memory_space<vmem>>, vector<1x64x128xf32>
    %9 = vector.shape_cast %8 : vector<1x64x128xf32> to vector<64x128xf32>
    %cst_12 = arith.constant dense<0.000000e+00> : vector<16x128xf32>
    %10 = tpu.matmul %7, %9, %cst_12 {dimension_numbers = #tpu.dot_dimension_numbers<[1], [0], [0], [1], [0, 0, 1, 1], [], []>} : vector<16x64xf32>, vector<64x128xf32>, vector<16x128xf32> -> vector<16x128xf32>
    %11 = vector.extract_strided_slice %6 {offsets = [1, 0], sizes = [16, 64], strides = [1, 1]} : vector<18x64xf32> to vector<16x64xf32>
    %c1_13 = arith.constant 1 : index
    %c0_14 = arith.constant 0 : index
    %c0_15 = arith.constant 0 : index
    %12 = vector.load %arg2[%c1_13, %c0_14, %c0_15] : memref<3x64x128xf32, #tpu.memory_space<vmem>>, vector<1x64x128xf32>
    %13 = vector.shape_cast %12 : vector<1x64x128xf32> to vector<64x128xf32>
    %cst_16 = arith.constant dense<0.000000e+00> : vector<16x128xf32>
    %14 = tpu.matmul %11, %13, %cst_16 {dimension_numbers = #tpu.dot_dimension_numbers<[1], [0], [0], [1], [0, 0, 1, 1], [], []>} : vector<16x64xf32>, vector<64x128xf32>, vector<16x128xf32> -> vector<16x128xf32>
    %15 = arith.addf %10, %14 : vector<16x128xf32>
    %16 = vector.extract_strided_slice %6 {offsets = [2, 0], sizes = [16, 64], strides = [1, 1]} : vector<18x64xf32> to vector<16x64xf32>
    %c2 = arith.constant 2 : index
    %c0_17 = arith.constant 0 : index
    %c0_18 = arith.constant 0 : index
    %17 = vector.load %arg2[%c2, %c0_17, %c0_18] : memref<3x64x128xf32, #tpu.memory_space<vmem>>, vector<1x64x128xf32>
    %18 = vector.shape_cast %17 : vector<1x64x128xf32> to vector<64x128xf32>
    %cst_19 = arith.constant dense<0.000000e+00> : vector<16x128xf32>
    %19 = tpu.matmul %16, %18, %cst_19 {dimension_numbers = #tpu.dot_dimension_numbers<[1], [0], [0], [1], [0, 0, 1, 1], [], []>} : vector<16x64xf32>, vector<64x128xf32>, vector<16x128xf32> -> vector<16x128xf32>
    %20 = arith.addf %15, %19 : vector<16x128xf32>
    %21 = vector.broadcast %2 : vector<1x128xf32> to vector<16x128xf32>
    %22 = arith.addf %20, %21 : vector<16x128xf32>
    %cst_20 = arith.constant 0.000000e+00 : f32
    %23 = vector.broadcast %cst_20 : f32 to vector<16x128xf32>
    %24 = arith.maximumf %22, %23 : vector<16x128xf32>
    %c0_21 = arith.constant 0 : index
    %c0_22 = arith.constant 0 : index
    %c0_23 = arith.constant 0 : index
    %25 = vector.load %arg4[%c0_21, %c0_22, %c0_23] : memref<2x16x128xf32, #tpu.memory_space<vmem>>, vector<1x16x128xf32>
    %26 = vector.shape_cast %25 : vector<1x16x128xf32> to vector<16x128xf32>
    %27 = vector.shape_cast %24 : vector<16x128xf32> to vector<1x16x128xf32>
    tpu.vector_store %arg4[%c0_21, %c0_22, %c0_23], %27 {strides = array<i32>} : memref<2x16x128xf32, #tpu.memory_space<vmem>>, vector<1x16x128xf32>,
    %c1_24 = arith.constant 1 : index
    %c0_25 = arith.constant 0 : index
    %c0_26 = arith.constant 0 : index
    %28 = vector.load %arg1[%c1_24, %c0_25, %c0_26] : memref<2x16x64xf32, #tpu.memory_space<vmem>>, vector<1x16x64xf32>
    %29 = vector.shape_cast %28 : vector<1x16x64xf32> to vector<16x64xf32>
    %c1_27 = arith.constant 1 : index
    %c0_28 = arith.constant 0 : index
    %30 = vector.load %arg5[%c1_27, %c0_28] : memref<18x64xf32, #tpu.memory_space<vmem>>, vector<16x64xf32>
    tpu.vector_store %arg5[%c1_27, %c0_28], %29 {strides = array<i32>} : memref<18x64xf32, #tpu.memory_space<vmem>>, vector<16x64xf32>,
    %c0_29 = arith.constant 0 : index
    %c0_30 = arith.constant 0 : index
    %31 = vector.load %arg5[%c0_29, %c0_30] : memref<18x64xf32, #tpu.memory_space<vmem>>, vector<18x64xf32>
    %32 = vector.extract_strided_slice %31 {offsets = [0, 0], sizes = [16, 64], strides = [1, 1]} : vector<18x64xf32> to vector<16x64xf32>
    %c0_31 = arith.constant 0 : index
    %c0_32 = arith.constant 0 : index
    %c0_33 = arith.constant 0 : index
    %33 = vector.load %arg2[%c0_31, %c0_32, %c0_33] : memref<3x64x128xf32, #tpu.memory_space<vmem>>, vector<1x64x128xf32>
    %34 = vector.shape_cast %33 : vector<1x64x128xf32> to vector<64x128xf32>
    %cst_34 = arith.constant dense<0.000000e+00> : vector<16x128xf32>
    %35 = tpu.matmul %32, %34, %cst_34 {dimension_numbers = #tpu.dot_dimension_numbers<[1], [0], [0], [1], [0, 0, 1, 1], [], []>} : vector<16x64xf32>, vector<64x128xf32>, vector<16x128xf32> -> vector<16x128xf32>
    %36 = vector.extract_strided_slice %31 {offsets = [1, 0], sizes = [16, 64], strides = [1, 1]} : vector<18x64xf32> to vector<16x64xf32>
    %c1_35 = arith.constant 1 : index
    %c0_36 = arith.constant 0 : index
    %c0_37 = arith.constant 0 : index
    %37 = vector.load %arg2[%c1_35, %c0_36, %c0_37] : memref<3x64x128xf32, #tpu.memory_space<vmem>>, vector<1x64x128xf32>
    %38 = vector.shape_cast %37 : vector<1x64x128xf32> to vector<64x128xf32>
    %cst_38 = arith.constant dense<0.000000e+00> : vector<16x128xf32>
    %39 = tpu.matmul %36, %38, %cst_38 {dimension_numbers = #tpu.dot_dimension_numbers<[1], [0], [0], [1], [0, 0, 1, 1], [], []>} : vector<16x64xf32>, vector<64x128xf32>, vector<16x128xf32> -> vector<16x128xf32>
    %40 = arith.addf %35, %39 : vector<16x128xf32>
    %41 = vector.extract_strided_slice %31 {offsets = [2, 0], sizes = [16, 64], strides = [1, 1]} : vector<18x64xf32> to vector<16x64xf32>
    %c2_39 = arith.constant 2 : index
    %c0_40 = arith.constant 0 : index
    %c0_41 = arith.constant 0 : index
    %42 = vector.load %arg2[%c2_39, %c0_40, %c0_41] : memref<3x64x128xf32, #tpu.memory_space<vmem>>, vector<1x64x128xf32>
    %43 = vector.shape_cast %42 : vector<1x64x128xf32> to vector<64x128xf32>
    %cst_42 = arith.constant dense<0.000000e+00> : vector<16x128xf32>
    %44 = tpu.matmul %41, %43, %cst_42 {dimension_numbers = #tpu.dot_dimension_numbers<[1], [0], [0], [1], [0, 0, 1, 1], [], []>} : vector<16x64xf32>, vector<64x128xf32>, vector<16x128xf32> -> vector<16x128xf32>
    %45 = arith.addf %40, %44 : vector<16x128xf32>
    %46 = vector.broadcast %2 : vector<1x128xf32> to vector<16x128xf32>
    %47 = arith.addf %45, %46 : vector<16x128xf32>
    %cst_43 = arith.constant 0.000000e+00 : f32
    %48 = vector.broadcast %cst_43 : f32 to vector<16x128xf32>
    %49 = arith.maximumf %47, %48 : vector<16x128xf32>
    %c1_44 = arith.constant 1 : index
    %c0_45 = arith.constant 0 : index
    %c0_46 = arith.constant 0 : index
    %50 = vector.load %arg4[%c1_44, %c0_45, %c0_46] : memref<2x16x128xf32, #tpu.memory_space<vmem>>, vector<1x16x128xf32>
    %51 = vector.shape_cast %50 : vector<1x16x128xf32> to vector<16x128xf32>
    %52 = vector.shape_cast %49 : vector<16x128xf32> to vector<1x16x128xf32>
    tpu.vector_store %arg4[%c1_44, %c0_45, %c0_46], %52 {strides = array<i32>} : memref<2x16x128xf32, #tpu.memory_space<vmem>>, vector<1x16x128xf32>,
    return
  }
  func.func @transform_0(%arg0: i32) -> (i32, i32, i32) {
    %c0_i32 = arith.constant 0 : i32
    %c0_i32_0 = arith.constant 0 : i32
    %c0_i32_1 = arith.constant 0 : i32
    %c0_i32_2 = arith.constant 0 : i32
    return %c0_i32, %c0_i32_0, %c0_i32_1 : i32, i32, i32
  }
  func.func @transform_1(%arg0: i32) -> (i32, i32, i32) {
    %c0_i32 = arith.constant 0 : i32
    %c0_i32_0 = arith.constant 0 : i32
    %c0_i32_1 = arith.constant 0 : i32
    %c0_i32_2 = arith.constant 0 : i32
    return %c0_i32, %c0_i32_0, %c0_i32_1 : i32, i32, i32
  }
  func.func @transform_2(%arg0: i32) -> (i32, i32) {
    %c0_i32 = arith.constant 0 : i32
    %c0_i32_0 = arith.constant 0 : i32
    %c0_i32_1 = arith.constant 0 : i32
    return %c0_i32, %c0_i32_0 : i32, i32
  }
  func.func @transform_3(%arg0: i32) -> (i32, i32, i32) {
    %c0_i32 = arith.constant 0 : i32
    %c0_i32_0 = arith.constant 0 : i32
    %c0_i32_1 = arith.constant 0 : i32
    %c0_i32_2 = arith.constant 0 : i32
    return %c0_i32, %c0_i32_0, %c0_i32_1 : i32, i32, i32
  }
}

</mosaic_0001>

<llo_original>
// kernel: tile.8
$region0: #{tile.8}
  #allocation0 [shape = 's32[1]{0}', space=sflag, size = 0x4, scoped, tag = 'scoped memory for tile.8']
  %s0 = inlined_call_operand.vmem [shape: f32[8], index: 0, kind: input, shape index: {}]
  %s1 = inlined_call_operand.vmem [shape: f32[16,8], index: 1, kind: output, shape index: {}]
  // Predicated region
  $region2: #{tile.8} parent=0 // pred_check
    _
  $region3: #{tile.8} parent=0 // pred_check_branch
    %3 = sbr.rel (0) target = $region5
  $region4: #{tile.8} parent=0 // pred_region
    _
  $region5: #{tile.8} parent=0 // pred_fallthru
    _
  %v4 = vld [vmem:[%s0] ss:$0 sm:$0xff]
  %5 = vst [vmem:[%s1] sm:$0xff] %v4
  %s6 = scalar_lea.vmem %s1, 8
  %7 = vst [vmem:[%s6] sm:$0xff] %v4

// kernel: tile.9
$region0: #{tile.9}
  %s0 = inlined_call_operand.vmem [shape: f32[16,8], index: 0, kind: input, shape index: {}]
  %s1 = inlined_call_operand.vmem [shape: f32[1,128], index: 1, kind: output, shape index: {}]
  $region1: #{tile.9} parent=0
    #allocation0 [shape = 'u8[4096]{0}', space=vmem, size = 0x1000, scoped, tag = 'scoped mem for output reshape']
    %v2 = vld [vmem:[%s0] sm:$0x1]
    %vm3 = vcmask 64512
    %4 = vst.msk [vmem:[#allocation0] sm:$0x1] %vm3, %v2
    %s5 = scalar_lea.vmem %s0, 15
    %v6 = vld [vmem:[%s5] sm:$0x1]
    %7 = vrot.lane.b32.xlu0 %v6, 120
    %v8 = vpop.permute.xlu0 %7
    %vm9 = vcmask 1048512
    %10 = vst.msk [vmem:[#allocation0] sm:$0x1] %vm9, %v8
    %s11 = scalar_lea.vmem %s0, 14
    %v12 = vld [vmem:[%s11] sm:$0x1]
    %13 = vrot.lane.b32.xlu0 %v12, 112
    %v14 = vpop.permute.xlu0 %13
    %vm15 = vcmask 982912
    %16 = vst.msk [vmem:[#allocation0] sm:$0x1] %vm15, %v14
    %s17 = scalar_lea.vmem %s0, 13
    %v18 = vld [vmem:[%s17] sm:$0x1]
    %19 = vrot.lane.b32.xlu0 %v18, 104
    %v20 = vpop.permute.xlu0 %19
    %vm21 = vcmask 917312
    %22 = vst.msk [vmem:[#allocation0] sm:$0x1] %vm21, %v20
    %s23 = scalar_lea.vmem %s0, 12
    %v24 = vld [vmem:[%s23] sm:$0x1]
    %25 = vrot.lane.b32.xlu0 %v24, 96
    %v26 = vpop.permute.xlu0 %25
    %vm27 = vcmask 851712
    %28 = vst.msk [vmem:[#allocation0] sm:$0x1] %vm27, %v26
    %s29 = scalar_lea.vmem %s0, 11
    %v30 = vld [vmem:[%s29] sm:$0x1]
    %31 = vrot.lane.b32.xlu0 %v30, 88
    %v32 = vpop.permute.xlu0 %31
    %vm33 = vcmask 786112
    %34 = vst.msk [vmem:[#allocation0] sm:$0x1] %vm33, %v32
    %s35 = scalar_lea.vmem %s0, 10
    %v36 = vld [vmem:[%s35] sm:$0x1]
    %37 = vrot.lane.b32.xlu0 %v36, 80
    %v38 = vpop.permute.xlu0 %37
    %vm39 = vcmask 720512
    %40 = vst.msk [vmem:[#allocation0] sm:$0x1] %vm39, %v38
    %s41 = scalar_lea.vmem %s0, 9
    %v42 = vld [vmem:[%s41] sm:$0x1]
    %43 = vrot.lane.b32.xlu0 %v42, 72
    %v44 = vpop.permute.xlu0 %43
    %vm45 = vcmask 654912
    %46 = vst.msk [vmem:[#allocation0] sm:$0x1] %vm45, %v44
    %s47 = scalar_lea.vmem %s0, 8
    %v48 = vld [vmem:[%s47] sm:$0x1]
    %49 = vrot.lane.b32.xlu0 %v48, 64
    %v50 = vpop.permute.xlu0 %49
    %vm51 = vcmask 589312
    %52 = vst.msk [vmem:[#allocation0] sm:$0x1] %vm51, %v50
    %s53 = scalar_lea.vmem %s0, 7
    %v54 = vld [vmem:[%s53] sm:$0x1]
    %55 = vrot.lane.b32.xlu0 %v54, 56
    %v56 = vpop.permute.xlu0 %55
    %vm57 = vcmask 523712
    %58 = vst.msk [vmem:[#allocation0] sm:$0x1] %vm57, %v56
    %s59 = scalar_lea.vmem %s0, 6
    %v60 = vld [vmem:[%s59] sm:$0x1]
    %61 = vrot.lane.b32.xlu0 %v60, 48
    %v62 = vpop.permute.xlu0 %61
    %vm63 = vcmask 458112
    %64 = vst.msk [vmem:[#allocation0] sm:$0x1] %vm63, %v62
    %s65 = scalar_lea.vmem %s0, 5
    %v66 = vld [vmem:[%s65] sm:$0x1]
    %67 = vrot.lane.b32.xlu0 %v66, 40
    %v68 = vpop.permute.xlu0 %67
    %vm69 = vcmask 392512
    %70 = vst.msk [vmem:[#allocation0] sm:$0x1] %vm69, %v68
    %s71 = scalar_lea.vmem %s0, 4
    %v72 = vld [vmem:[%s71] sm:$0x1]
    %73 = vrot.lane.b32.xlu0 %v72, 32
    %v74 = vpop.permute.xlu0 %73
    %vm75 = vcmask 326912
    %76 = vst.msk [vmem:[#allocation0] sm:$0x1] %vm75, %v74
    %s77 = scalar_lea.vmem %s0, 3
    %v78 = vld [vmem:[%s77] sm:$0x1]
    %79 = vrot.lane.b32.xlu0 %v78, 24
    %v80 = vpop.permute.xlu0 %79
    %vm81 = vcmask 261312
    %82 = vst.msk [vmem:[#allocation0] sm:$0x1] %vm81, %v80
    %s83 = scalar_lea.vmem %s0, 2
    %v84 = vld [vmem:[%s83] sm:$0x1]
    %85 = vrot.lane.b32.xlu0 %v84, 16
    %v86 = vpop.permute.xlu0 %85
    %vm87 = vcmask 195712
    %88 = vst.msk [vmem:[#allocation0] sm:$0x1] %vm87, %v86
    %s89 = scalar_lea.vmem %s0, 1
    %v90 = vld [vmem:[%s89] sm:$0x1]
    %91 = vrot.lane.b32.xlu0 %v90, 8
    %v92 = vpop.permute.xlu0 %91
    %vm93 = vcmask 130112
    %94 = vst.msk [vmem:[#allocation0] sm:$0x1] %vm93, %v92
    %s96 = sshllo.u32 0, 1
    %v98 = vld [vmem:[#allocation0] sm:%s96]
    %s99 = sshllo.u32 0, 1
    %100 = vst [vmem:[%s1] sm:%s99] %v98

// kernel: dist_module_forward.1
$region0: #{dist_module_forward.1}
  #allocation0 [shape = 'u32[]', space=smem, size = 0x4, offset = 0x4, fixed_abs, tag = 'smem constant byte address 0x4 - core index']
  #allocation1 [shape = 'u32[144,128]{1,0:T(1,128)}', space=vmem, size = 0x12000, scoped, tag = 'internal scratch']
  #allocation2 [shape = 'f32[18,64]{1,0:T(8,128)}', space=vmem, size = 0x3000, scoped, tag = 'scratch operand']
  %s0 = inlined_call_operand.vmem [shape: f32[2,16,64], index: 0, kind: input, shape index: {}]
  %s1 = inlined_call_operand.vmem [shape: f32[3,64,128], index: 1, kind: input, shape index: {}]
  %s2 = inlined_call_operand.vmem [shape: f32[1,128], index: 2, kind: input, shape index: {}]
  %s3 = inlined_call_operand.vmem [shape: f32[2,16,128], index: 3, kind: output, shape index: {}]
  %s4 = sld [smem:[#allocation0]]
  $region22: #{dist_module_forward.1} parent=0
    _
  %s6 = ssub.s32 1, %s4
  %s7 = scalar_select 0, %s6, %s4
  // Predicated region
  $region2: #{dist_module_forward.1} parent=0 // pred_check
    _
  $region3: #{dist_module_forward.1} parent=0 // pred_check_branch
    %9 = sbr.rel (0) target = $region5
  $region4: #{dist_module_forward.1} parent=0 // pred_region
    _
  $region5: #{dist_module_forward.1} parent=0 // pred_fallthru
    _
  // Predicated region
  $region6: #{dist_module_forward.1} parent=0 // pred_check
    _
  $region7: #{dist_module_forward.1} parent=0 // pred_check_branch
    %11 = sbr.rel (0) target = $region9
  $region8: #{dist_module_forward.1} parent=0 // pred_region
    _
  $region9: #{dist_module_forward.1} parent=0 // pred_fallthru
    _
  // Predicated region
  $region10: #{dist_module_forward.1} parent=0 // pred_check
    _
  $region11: #{dist_module_forward.1} parent=0 // pred_check_branch
    %13 = sbr.rel (0) target = $region13
  $region12: #{dist_module_forward.1} parent=0 // pred_region
    _
  $region13: #{dist_module_forward.1} parent=0 // pred_fallthru
    _
  %vm14 = vcmask 523264
  %15 = vst.msk [vmem:[#allocation2] sm:$0xff] %vm14, 0.0
  %16 = vst.msk [vmem:[#allocation2 + $0x8] sm:$0xff] %vm14, 0.0
  %vm17 = vcmask 517120
  %18 = vst.msk [vmem:[#allocation2 + $0x10] sm:$0x3] %vm17, 0.0
  %v19 = vld [vmem:[%s2] sm:$0x1]
  %v20 = vld [vmem:[%s0] sm:$0xff]
  %v21 = vld [vmem:[%s0 + $0x8] sm:$0xff]
  %22 = vst.msk [vmem:[#allocation2 + $0x1] sm:$0xff] %vm14, %v20
  %23 = vst.msk [vmem:[#allocation2 + $0x9] sm:$0xff] %vm14, %v21
  %v24 = vld [vmem:[#allocation2] sm:$0xff]
  %v25 = vld [vmem:[#allocation2 + $0x8] sm:$0xff]
  %v26 = vld [vmem:[#allocation2 + $0x10] sm:$0x3]
  %v27 = vld [vmem:[%s1] sm:$0xff]
  %v28 = vld [vmem:[%s1 + $0x8] sm:$0xff]
  %v29 = vld [vmem:[%s1 + $0x10] sm:$0xff]
  %v30 = vld [vmem:[%s1 + $0x18] sm:$0xff]
  %v31 = vld [vmem:[%s1 + $0x20] sm:$0xff]
  %v32 = vld [vmem:[%s1 + $0x28] sm:$0xff]
  %v33 = vld [vmem:[%s1 + $0x30] sm:$0xff]
  %v34 = vld [vmem:[%s1 + $0x38] sm:$0xff]
  %s35 = scalar_lea.vmem %s1, 64
  %v36 = vld [vmem:[%s35] sm:$0xff]
  %v37 = vld [vmem:[%s35 + $0x8] sm:$0xff]
  %v38 = vld [vmem:[%s35 + $0x10] sm:$0xff]
  %v39 = vld [vmem:[%s35 + $0x18] sm:$0xff]
  %v40 = vld [vmem:[%s35 + $0x20] sm:$0xff]
  %v41 = vld [vmem:[%s35 + $0x28] sm:$0xff]
  %v42 = vld [vmem:[%s35 + $0x30] sm:$0xff]
  %v43 = vld [vmem:[%s35 + $0x38] sm:$0xff]
  %vm47 = vcmask 1046528
  %v48 = vrot.slane %v24, 1
  %v49 = vrot.slane %v25, 1
  %v50 = vsel %vm47, %v48, %v49
  %v51 = vrot.slane %v26, 1
  %v52 = vsel %vm47, %v49, %v51
  %v53 = vsel %vm14, %v50, 0
  %v55 = vsel %vm14, %v52, 0
  %57 = vmatprep.subr.mxu0 0.0
  %58 = vmatpush1.msra.mxu0 %v36
  %59 = vmatprep.subr.mxu0 0.0
  %60 = vmatpush1.msra.mxu0 %v37
  %61 = vmatprep.subr.mxu0 0.0
  %62 = vmatpush1.msra.mxu0 %v38
  %63 = vmatprep.subr.mxu0 0.0
  %64 = vmatpush1.msra.mxu0 %v39
  %65 = vmatprep.subr.mxu0 0.0
  %66 = vmatpush1.msra.mxu0 %v40
  %67 = vmatprep.subr.mxu0 0.0
  %68 = vmatpush1.msra.mxu0 %v41
  %69 = vmatprep.subr.mxu0 0.0
  %70 = vmatpush1.msra.mxu0 %v42
  %71 = vmatprep.subr.mxu0 0.0
  %72 = vmatpush1.msra.mxu0 %v43
  %73 = vmatprep.subr.mxu0 0.0
  %74 = vmatpush1.msra.mxu0 0.0
  %75 = vmatprep.subr.mxu0 0.0
  %76 = vmatpush1.msra.mxu0 0.0
  %77 = vmatprep.subr.mxu0 0.0
  %78 = vmatpush1.msra.mxu0 0.0
  %79 = vmatprep.subr.mxu0 0.0
  %80 = vmatpush1.msra.mxu0 0.0
  %81 = vmatprep.subr.mxu0 0.0
  %82 = vmatpush1.msra.mxu0 0.0
  %83 = vmatprep.subr.mxu0 0.0
  %84 = vmatpush1.msra.mxu0 0.0
  %85 = vmatprep.subr.mxu0 0.0
  %86 = vmatpush1.msra.mxu0 0.0
  %87 = vmatprep.subr.mxu0 0.0
  %88 = vmatpush1.msra.mxu0 0.0
  %89 = vmatprep.subr.mxu0 0.0
  %90 = vmatpush1.msra.mxu0 0.0
  %91 = vmatprep.subr.mxu0 0.0
  %92 = vmatpush1.msra.mxu0 0.0
  %93 = vmatprep.subr.mxu0 0.0
  %94 = vmatpush1.msra.mxu0 0.0
  %95 = vmatprep.subr.mxu0 0.0
  %96 = vmatpush1.msra.mxu0 0.0
  %97 = vmatprep.subr.mxu0 0.0
  %98 = vmatpush1.msra.mxu0 0.0
  %99 = vmatprep.subr.mxu0 0.0
  %100 = vmatpush1.msra.mxu0 0.0
  %101 = vmatprep.subr.mxu0 0.0
  %102 = vmatpush1.msra.mxu0 0.0
  %103 = vmatprep.subr.mxu0 0.0
  %104 = vmatpush1.msra.mxu0 0.0
  %105 = vmatprep.subr.mxu0 0.0
  %106 = vmatpush1.msra.mxu0 0.0
  %107 = vmatprep.subr.mxu0 0.0
  %108 = vmatpush1.msra.mxu0 0.0
  %109 = vmatprep.subr.mxu0 0.0
  %110 = vmatpush1.msra.mxu0 0.0
  %111 = vmatprep.subr.mxu0 0.0
  %112 = vmatpush1.msra.mxu0 0.0
  %113 = vmatprep.subr.mxu0 0.0
  %114 = vmatpush1.msra.mxu0 0.0
  %115 = vmatprep.subr.mxu0 0.0
  %116 = vmatpush1.msra.mxu0 0.0
  %117 = vmatprep.subr.mxu0 0.0
  %118 = vmatpush1.msra.mxu0 0.0
  %119 = vmatprep.subr.mxu0 0.0
  %120 = vmatpush1.msra.mxu0 0.0
  %121 = vmatprep.mubr.f32.mxu0 0.0
  %122 = vmatmul.mubr.f32.gmra.mrb[0].mxu0 %v53
  %v123 = vpop.f32.mrb[0].mxu0
  %v124 = vadd.f32 0.0, %v123
  %v125 = vpop.f32.mrb[0].mxu0
  %126 = vmatprep.mubr.f32.mxu0 0.0
  %127 = vmatmul.mubr.f32.gmra.mrb[0].mxu0 %v55
  %v128 = vpop.f32.mrb[0].mxu0
  %v129 = vadd.f32 0.0, %v128
  %v130 = vpop.f32.mrb[0].mxu0
  %131 = vdwg.mxu0
  %v132 = vsel %vm14, %v24, 0
  %v134 = vsel %vm14, %v25, 0
  %136 = vmatprep.subr.mxu0 0.0
  %137 = vmatpush1.msra.mxu0 %v27
  %138 = vmatprep.subr.mxu0 0.0
  %139 = vmatpush1.msra.mxu0 %v28
  %140 = vmatprep.subr.mxu0 0.0
  %141 = vmatpush1.msra.mxu0 %v29
  %142 = vmatprep.subr.mxu0 0.0
  %143 = vmatpush1.msra.mxu0 %v30
  %144 = vmatprep.subr.mxu0 0.0
  %145 = vmatpush1.msra.mxu0 %v31
  %146 = vmatprep.subr.mxu0 0.0
  %147 = vmatpush1.msra.mxu0 %v32
  %148 = vmatprep.subr.mxu0 0.0
  %149 = vmatpush1.msra.mxu0 %v33
  %150 = vmatprep.subr.mxu0 0.0
  %151 = vmatpush1.msra.mxu0 %v34
  %152 = vmatprep.subr.mxu0 0.0
  %153 = vmatpush1.msra.mxu0 0.0
  %154 = vmatprep.subr.mxu0 0.0
  %155 = vmatpush1.msra.mxu0 0.0
  %156 = vmatprep.subr.mxu0 0.0
  %157 = vmatpush1.msra.mxu0 0.0
  %158 = vmatprep.subr.mxu0 0.0
  %159 = vmatpush1.msra.mxu0 0.0
  %160 = vmatprep.subr.mxu0 0.0
  %161 = vmatpush1.msra.mxu0 0.0
  %162 = vmatprep.subr.mxu0 0.0
  %163 = vmatpush1.msra.mxu0 0.0
  %164 = vmatprep.subr.mxu0 0.0
  %165 = vmatpush1.msra.mxu0 0.0
  %166 = vmatprep.subr.mxu0 0.0
  %167 = vmatpush1.msra.mxu0 0.0
  %168 = vmatprep.subr.mxu0 0.0
  %169 = vmatpush1.msra.mxu0 0.0
  %170 = vmatprep.subr.mxu0 0.0
  %171 = vmatpush1.msra.mxu0 0.0
  %172 = vmatprep.subr.mxu0 0.0
  %173 = vmatpush1.msra.mxu0 0.0
  %174 = vmatprep.subr.mxu0 0.0
  %175 = vmatpush1.msra.mxu0 0.0
  %176 = vmatprep.subr.mxu0 0.0
  %177 = vmatpush1.msra.mxu0 0.0
  %178 = vmatprep.subr.mxu0 0.0
  %179 = vmatpush1.msra.mxu0 0.0
  %180 = vmatprep.subr.mxu0 0.0
  %181 = vmatpush1.msra.mxu0 0.0
  %182 = vmatprep.subr.mxu0 0.0
  %183 = vmatpush1.msra.mxu0 0.0
  %184 = vmatprep.subr.mxu0 0.0
  %185 = vmatpush1.msra.mxu0 0.0
  %186 = vmatprep.subr.mxu0 0.0
  %187 = vmatpush1.msra.mxu0 0.0
  %188 = vmatprep.subr.mxu0 0.0
  %189 = vmatpush1.msra.mxu0 0.0
  %190 = vmatprep.subr.mxu0 0.0
  %191 = vmatpush1.msra.mxu0 0.0
  %192 = vmatprep.subr.mxu0 0.0
  %193 = vmatpush1.msra.mxu0 0.0
  %194 = vmatprep.subr.mxu0 0.0
  %195 = vmatpush1.msra.mxu0 0.0
  %196 = vmatprep.subr.mxu0 0.0
  %197 = vmatpush1.msra.mxu0 0.0
  %198 = vmatprep.subr.mxu0 0.0
  %199 = vmatpush1.msra.mxu0 0.0
  %200 = vmatprep.mubr.f32.mxu0 0.0
  %201 = vmatmul.mubr.f32.gmra.mrb[0].mxu0 %v132
  %v202 = vpop.f32.mrb[0].mxu0
  %v203 = vadd.f32 %v124, %v202
  %v204 = vpop.f32.mrb[0].mxu0
  %205 = vmatprep.mubr.f32.mxu0 0.0
  %206 = vmatmul.mubr.f32.gmra.mrb[0].mxu0 %v134
  %v207 = vpop.f32.mrb[0].mxu0
  %v208 = vadd.f32 %v129, %v207
  %v209 = vpop.f32.mrb[0].mxu0
  %210 = vdwg.mxu0
  %s211 = scalar_lea.vmem %s1, 128
  %v212 = vld [vmem:[%s211] sm:$0xff]
  %v213 = vld [vmem:[%s211 + $0x8] sm:$0xff]
  %v214 = vld [vmem:[%s211 + $0x10] sm:$0xff]
  %v215 = vld [vmem:[%s211 + $0x18] sm:$0xff]
  %v216 = vld [vmem:[%s211 + $0x20] sm:$0xff]
  %v217 = vld [vmem:[%s211 + $0x28] sm:$0xff]
  %v218 = vld [vmem:[%s211 + $0x30] sm:$0xff]
  %v219 = vld [vmem:[%s211 + $0x38] sm:$0xff]
  %vm220 = vcmask 1045504
  %v221 = vrot.slane %v24, 2
  %v222 = vrot.slane %v25, 2
  %v223 = vsel %vm220, %v221, %v222
  %v224 = vrot.slane %v26, 2
  %v225 = vsel %vm220, %v222, %v224
  %v226 = vsel %vm14, %v223, 0
  %v228 = vsel %vm14, %v225, 0
  %230 = vmatprep.subr.mxu0 0.0
  %231 = vmatpush1.msra.mxu0 %v212
  %232 = vmatprep.subr.mxu0 0.0
  %233 = vmatpush1.msra.mxu0 %v213
  %234 = vmatprep.subr.mxu0 0.0
  %235 = vmatpush1.msra.mxu0 %v214
  %236 = vmatprep.subr.mxu0 0.0
  %237 = vmatpush1.msra.mxu0 %v215
  %238 = vmatprep.subr.mxu0 0.0
  %239 = vmatpush1.msra.mxu0 %v216
  %240 = vmatprep.subr.mxu0 0.0
  %241 = vmatpush1.msra.mxu0 %v217
  %242 = vmatprep.subr.mxu0 0.0
  %243 = vmatpush1.msra.mxu0 %v218
  %244 = vmatprep.subr.mxu0 0.0
  %245 = vmatpush1.msra.mxu0 %v219
  %246 = vmatprep.subr.mxu0 0.0
  %247 = vmatpush1.msra.mxu0 0.0
  %248 = vmatprep.subr.mxu0 0.0
  %249 = vmatpush1.msra.mxu0 0.0
  %250 = vmatprep.subr.mxu0 0.0
  %251 = vmatpush1.msra.mxu0 0.0
  %252 = vmatprep.subr.mxu0 0.0
  %253 = vmatpush1.msra.mxu0 0.0
  %254 = vmatprep.subr.mxu0 0.0
  %255 = vmatpush1.msra.mxu0 0.0
  %256 = vmatprep.subr.mxu0 0.0
  %257 = vmatpush1.msra.mxu0 0.0
  %258 = vmatprep.subr.mxu0 0.0
  %259 = vmatpush1.msra.mxu0 0.0
  %260 = vmatprep.subr.mxu0 0.0
  %261 = vmatpush1.msra.mxu0 0.0
  %262 = vmatprep.subr.mxu0 0.0
  %263 = vmatpush1.msra.mxu0 0.0
  %264 = vmatprep.subr.mxu0 0.0
  %265 = vmatpush1.msra.mxu0 0.0
  %266 = vmatprep.subr.mxu0 0.0
  %267 = vmatpush1.msra.mxu0 0.0
  %268 = vmatprep.subr.mxu0 0.0
  %269 = vmatpush1.msra.mxu0 0.0
  %270 = vmatprep.subr.mxu0 0.0
  %271 = vmatpush1.msra.mxu0 0.0
  %272 = vmatprep.subr.mxu0 0.0
  %273 = vmatpush1.msra.mxu0 0.0
  %274 = vmatprep.subr.mxu0 0.0
  %275 = vmatpush1.msra.mxu0 0.0
  %276 = vmatprep.subr.mxu0 0.0
  %277 = vmatpush1.msra.mxu0 0.0
  %278 = vmatprep.subr.mxu0 0.0
  %279 = vmatpush1.msra.mxu0 0.0
  %280 = vmatprep.subr.mxu0 0.0
  %281 = vmatpush1.msra.mxu0 0.0
  %282 = vmatprep.subr.mxu0 0.0
  %283 = vmatpush1.msra.mxu0 0.0
  %284 = vmatprep.subr.mxu0 0.0
  %285 = vmatpush1.msra.mxu0 0.0
  %286 = vmatprep.subr.mxu0 0.0
  %287 = vmatpush1.msra.mxu0 0.0
  %288 = vmatprep.subr.mxu0 0.0
  %289 = vmatpush1.msra.mxu0 0.0
  %290 = vmatprep.subr.mxu0 0.0
  %291 = vmatpush1.msra.mxu0 0.0
  %292 = vmatprep.subr.mxu0 0.0
  %293 = vmatpush1.msra.mxu0 0.0
  %294 = vmatprep.mubr.f32.mxu0 0.0
  %295 = vmatmul.mubr.f32.gmra.mrb[0].mxu0 %v226
  %v296 = vpop.f32.mrb[0].mxu0
  %v297 = vadd.f32 0.0, %v296
  %v298 = vpop.f32.mrb[0].mxu0
  %299 = vmatprep.mubr.f32.mxu0 0.0
  %300 = vmatmul.mubr.f32.gmra.mrb[0].mxu0 %v228
  %v301 = vpop.f32.mrb[0].mxu0
  %v302 = vadd.f32 0.0, %v301
  %v303 = vpop.f32.mrb[0].mxu0
  %304 = vdwg.mxu0
  %v305 = vadd.f32 %v203, %v297
  %v306 = vadd.f32 %v208, %v302
  %v308 = vlaneseq
  %v309 = vshrl.u32 %v308, 7
  %v310 = vsub.s32 0, %v309
  %v311 = vrot.slane %v19, %v310
  %v313 = vadd.f32 %v305, %v311
  %v314 = vadd.f32 %v306, %v311
  %v315 = vmax.f32 %v313, 0.0
  %v316 = vmax.f32 %v314, 0.0
  %317 = vst [vmem:[%s3] sm:$0xff] %v315
  %318 = vst [vmem:[%s3 + $0x8] sm:$0xff] %v316
  %s319 = scalar_lea.vmem %s0, 16
  %v320 = vld [vmem:[%s319] sm:$0xff]
  %v321 = vld [vmem:[%s319 + $0x8] sm:$0xff]
  %322 = vst.msk [vmem:[#allocation2 + $0x1] sm:$0xff] %vm14, %v320
  %323 = vst.msk [vmem:[#allocation2 + $0x9] sm:$0xff] %vm14, %v321
  %v324 = vld [vmem:[#allocation2] sm:$0xff]
  %v325 = vld [vmem:[#allocation2 + $0x8] sm:$0xff]
  %v326 = vld [vmem:[#allocation2 + $0x10] sm:$0x3]
  %v327 = vld [vmem:[%s1] sm:$0xff]
  %v328 = vld [vmem:[%s1 + $0x8] sm:$0xff]
  %v329 = vld [vmem:[%s1 + $0x10] sm:$0xff]
  %v330 = vld [vmem:[%s1 + $0x18] sm:$0xff]
  %v331 = vld [vmem:[%s1 + $0x20] sm:$0xff]
  %v332 = vld [vmem:[%s1 + $0x28] sm:$0xff]
  %v333 = vld [vmem:[%s1 + $0x30] sm:$0xff]
  %v334 = vld [vmem:[%s1 + $0x38] sm:$0xff]
  %v335 = vld [vmem:[%s35] sm:$0xff]
  %v336 = vld [vmem:[%s35 + $0x8] sm:$0xff]
  %v337 = vld [vmem:[%s35 + $0x10] sm:$0xff]
  %v338 = vld [vmem:[%s35 + $0x18] sm:$0xff]
  %v339 = vld [vmem:[%s35 + $0x20] sm:$0xff]
  %v340 = vld [vmem:[%s35 + $0x28] sm:$0xff]
  %v341 = vld [vmem:[%s35 + $0x30] sm:$0xff]
  %v342 = vld [vmem:[%s35 + $0x38] sm:$0xff]
  %v346 = vrot.slane %v324, 1
  %v347 = vrot.slane %v325, 1
  %v348 = vsel %vm47, %v346, %v347
  %v349 = vrot.slane %v326, 1
  %v350 = vsel %vm47, %v347, %v349
  %v351 = vsel %vm14, %v348, 0
  %v353 = vsel %vm14, %v350, 0
  %355 = vmatprep.subr.mxu0 0.0
  %356 = vmatpush1.msra.mxu0 %v335
  %357 = vmatprep.subr.mxu0 0.0
  %358 = vmatpush1.msra.mxu0 %v336
  %359 = vmatprep.subr.mxu0 0.0
  %360 = vmatpush1.msra.mxu0 %v337
  %361 = vmatprep.subr.mxu0 0.0
  %362 = vmatpush1.msra.mxu0 %v338
  %363 = vmatprep.subr.mxu0 0.0
  %364 = vmatpush1.msra.mxu0 %v339
  %365 = vmatprep.subr.mxu0 0.0
  %366 = vmatpush1.msra.mxu0 %v340
  %367 = vmatprep.subr.mxu0 0.0
  %368 = vmatpush1.msra.mxu0 %v341
  %369 = vmatprep.subr.mxu0 0.0
  %370 = vmatpush1.msra.mxu0 %v342
  %371 = vmatprep.subr.mxu0 0.0
  %372 = vmatpush1.msra.mxu0 0.0
  %373 = vmatprep.subr.mxu0 0.0
  %374 = vmatpush1.msra.mxu0 0.0
  %375 = vmatprep.subr.mxu0 0.0
  %376 = vmatpush1.msra.mxu0 0.0
  %377 = vmatprep.subr.mxu0 0.0
  %378 = vmatpush1.msra.mxu0 0.0
  %379 = vmatprep.subr.mxu0 0.0
  %380 = vmatpush1.msra.mxu0 0.0
  %381 = vmatprep.subr.mxu0 0.0
  %382 = vmatpush1.msra.mxu0 0.0
  %383 = vmatprep.subr.mxu0 0.0
  %384 = vmatpush1.msra.mxu0 0.0
  %385 = vmatprep.subr.mxu0 0.0
  %386 = vmatpush1.msra.mxu0 0.0
  %387 = vmatprep.subr.mxu0 0.0
  %388 = vmatpush1.msra.mxu0 0.0
  %389 = vmatprep.subr.mxu0 0.0
  %390 = vmatpush1.msra.mxu0 0.0
  %391 = vmatprep.subr.mxu0 0.0
  %392 = vmatpush1.msra.mxu0 0.0
  %393 = vmatprep.subr.mxu0 0.0
  %394 = vmatpush1.msra.mxu0 0.0
  %395 = vmatprep.subr.mxu0 0.0
  %396 = vmatpush1.msra.mxu0 0.0
  %397 = vmatprep.subr.mxu0 0.0
  %398 = vmatpush1.msra.mxu0 0.0
  %399 = vmatprep.subr.mxu0 0.0
  %400 = vmatpush1.msra.mxu0 0.0
  %401 = vmatprep.subr.mxu0 0.0
  %402 = vmatpush1.msra.mxu0 0.0
  %403 = vmatprep.subr.mxu0 0.0
  %404 = vmatpush1.msra.mxu0 0.0
  %405 = vmatprep.subr.mxu0 0.0
  %406 = vmatpush1.msra.mxu0 0.0
  %407 = vmatprep.subr.mxu0 0.0
  %408 = vmatpush1.msra.mxu0 0.0
  %409 = vmatprep.subr.mxu0 0.0
  %410 = vmatpush1.msra.mxu0 0.0
  %411 = vmatprep.subr.mxu0 0.0
  %412 = vmatpush1.msra.mxu0 0.0
  %413 = vmatprep.subr.mxu0 0.0
  %414 = vmatpush1.msra.mxu0 0.0
  %415 = vmatprep.subr.mxu0 0.0
  %416 = vmatpush1.msra.mxu0 0.0
  %417 = vmatprep.subr.mxu0 0.0
  %418 = vmatpush1.msra.mxu0 0.0
  %419 = vmatprep.mubr.f32.mxu0 0.0
  %420 = vmatmul.mubr.f32.gmra.mrb[0].mxu0 %v351
  %v421 = vpop.f32.mrb[0].mxu0
  %v422 = vadd.f32 0.0, %v421
  %v423 = vpop.f32.mrb[0].mxu0
  %424 = vmatprep.mubr.f32.mxu0 0.0
  %425 = vmatmul.mubr.f32.gmra.mrb[0].mxu0 %v353
  %v426 = vpop.f32.mrb[0].mxu0
  %v427 = vadd.f32 0.0, %v426
  %v428 = vpop.f32.mrb[0].mxu0
  %429 = vdwg.mxu0
  %v430 = vsel %vm14, %v324, 0
  %v432 = vsel %vm14, %v325, 0
  %434 = vmatprep.subr.mxu0 0.0
  %435 = vmatpush1.msra.mxu0 %v327
  %436 = vmatprep.subr.mxu0 0.0
  %437 = vmatpush1.msra.mxu0 %v328
  %438 = vmatprep.subr.mxu0 0.0
  %439 = vmatpush1.msra.mxu0 %v329
  %440 = vmatprep.subr.mxu0 0.0
  %441 = vmatpush1.msra.mxu0 %v330
  %442 = vmatprep.subr.mxu0 0.0
  %443 = vmatpush1.msra.mxu0 %v331
  %444 = vmatprep.subr.mxu0 0.0
  %445 = vmatpush1.msra.mxu0 %v332
  %446 = vmatprep.subr.mxu0 0.0
  %447 = vmatpush1.msra.mxu0 %v333
  %448 = vmatprep.subr.mxu0 0.0
  %449 = vmatpush1.msra.mxu0 %v334
  %450 = vmatprep.subr.mxu0 0.0
  %451 = vmatpush1.msra.mxu0 0.0
  %452 = vmatprep.subr.mxu0 0.0
  %453 = vmatpush1.msra.mxu0 0.0
  %454 = vmatprep.subr.mxu0 0.0
  %455 = vmatpush1.msra.mxu0 0.0
  %456 = vmatprep.subr.mxu0 0.0
  %457 = vmatpush1.msra.mxu0 0.0
  %458 = vmatprep.subr.mxu0 0.0
  %459 = vmatpush1.msra.mxu0 0.0
  %460 = vmatprep.subr.mxu0 0.0
  %461 = vmatpush1.msra.mxu0 0.0
  %462 = vmatprep.subr.mxu0 0.0
  %463 = vmatpush1.msra.mxu0 0.0
  %464 = vmatprep.subr.mxu0 0.0
  %465 = vmatpush1.msra.mxu0 0.0
  %466 = vmatprep.subr.mxu0 0.0
  %467 = vmatpush1.msra.mxu0 0.0
  %468 = vmatprep.subr.mxu0 0.0
  %469 = vmatpush1.msra.mxu0 0.0
  %470 = vmatprep.subr.mxu0 0.0
  %471 = vmatpush1.msra.mxu0 0.0
  %472 = vmatprep.subr.mxu0 0.0
  %473 = vmatpush1.msra.mxu0 0.0
  %474 = vmatprep.subr.mxu0 0.0
  %475 = vmatpush1.msra.mxu0 0.0
  %476 = vmatprep.subr.mxu0 0.0
  %477 = vmatpush1.msra.mxu0 0.0
  %478 = vmatprep.subr.mxu0 0.0
  %479 = vmatpush1.msra.mxu0 0.0
  %480 = vmatprep.subr.mxu0 0.0
  %481 = vmatpush1.msra.mxu0 0.0
  %482 = vmatprep.subr.mxu0 0.0
  %483 = vmatpush1.msra.mxu0 0.0
  %484 = vmatprep.subr.mxu0 0.0
  %485 = vmatpush1.msra.mxu0 0.0
  %486 = vmatprep.subr.mxu0 0.0
  %487 = vmatpush1.msra.mxu0 0.0
  %488 = vmatprep.subr.mxu0 0.0
  %489 = vmatpush1.msra.mxu0 0.0
  %490 = vmatprep.subr.mxu0 0.0
  %491 = vmatpush1.msra.mxu0 0.0
  %492 = vmatprep.subr.mxu0 0.0
  %493 = vmatpush1.msra.mxu0 0.0
  %494 = vmatprep.subr.mxu0 0.0
  %495 = vmatpush1.msra.mxu0 0.0
  %496 = vmatprep.subr.mxu0 0.0
  %497 = vmatpush1.msra.mxu0 0.0
  %498 = vmatprep.mubr.f32.mxu0 0.0
  %499 = vmatmul.mubr.f32.gmra.mrb[0].mxu0 %v430
  %v500 = vpop.f32.mrb[0].mxu0
  %v501 = vadd.f32 %v422, %v500
  %v502 = vpop.f32.mrb[0].mxu0
  %503 = vmatprep.mubr.f32.mxu0 0.0
  %504 = vmatmul.mubr.f32.gmra.mrb[0].mxu0 %v432
  %v505 = vpop.f32.mrb[0].mxu0
  %v506 = vadd.f32 %v427, %v505
  %v507 = vpop.f32.mrb[0].mxu0
  %508 = vdwg.mxu0
  %v509 = vld [vmem:[%s211] sm:$0xff]
  %v510 = vld [vmem:[%s211 + $0x8] sm:$0xff]
  %v511 = vld [vmem:[%s211 + $0x10] sm:$0xff]
  %v512 = vld [vmem:[%s211 + $0x18] sm:$0xff]
  %v513 = vld [vmem:[%s211 + $0x20] sm:$0xff]
  %v514 = vld [vmem:[%s211 + $0x28] sm:$0xff]
  %v515 = vld [vmem:[%s211 + $0x30] sm:$0xff]
  %v516 = vld [vmem:[%s211 + $0x38] sm:$0xff]
  %v517 = vrot.slane %v324, 2
  %v518 = vrot.slane %v325, 2
  %v519 = vsel %vm220, %v517, %v518
  %v520 = vrot.slane %v326, 2
  %v521 = vsel %vm220, %v518, %v520
  %v522 = vsel %vm14, %v519, 0
  %v524 = vsel %vm14, %v521, 0
  %526 = vmatprep.subr.mxu0 0.0
  %527 = vmatpush1.msra.mxu0 %v509
  %528 = vmatprep.subr.mxu0 0.0
  %529 = vmatpush1.msra.mxu0 %v510
  %530 = vmatprep.subr.mxu0 0.0
  %531 = vmatpush1.msra.mxu0 %v511
  %532 = vmatprep.subr.mxu0 0.0
  %533 = vmatpush1.msra.mxu0 %v512
  %534 = vmatprep.subr.mxu0 0.0
  %535 = vmatpush1.msra.mxu0 %v513
  %536 = vmatprep.subr.mxu0 0.0
  %537 = vmatpush1.msra.mxu0 %v514
  %538 = vmatprep.subr.mxu0 0.0
  %539 = vmatpush1.msra.mxu0 %v515
  %540 = vmatprep.subr.mxu0 0.0
  %541 = vmatpush1.msra.mxu0 %v516
  %542 = vmatprep.subr.mxu0 0.0
  %543 = vmatpush1.msra.mxu0 0.0
  %544 = vmatprep.subr.mxu0 0.0
  %545 = vmatpush1.msra.mxu0 0.0
  %546 = vmatprep.subr.mxu0 0.0
  %547 = vmatpush1.msra.mxu0 0.0
  %548 = vmatprep.subr.mxu0 0.0
  %549 = vmatpush1.msra.mxu0 0.0
  %550 = vmatprep.subr.mxu0 0.0
  %551 = vmatpush1.msra.mxu0 0.0
  %552 = vmatprep.subr.mxu0 0.0
  %553 = vmatpush1.msra.mxu0 0.0
  %554 = vmatprep.subr.mxu0 0.0
  %555 = vmatpush1.msra.mxu0 0.0
  %556 = vmatprep.subr.mxu0 0.0
  %557 = vmatpush1.msra.mxu0 0.0
  %558 = vmatprep.subr.mxu0 0.0
  %559 = vmatpush1.msra.mxu0 0.0
  %560 = vmatprep.subr.mxu0 0.0
  %561 = vmatpush1.msra.mxu0 0.0
  %562 = vmatprep.subr.mxu0 0.0
  %563 = vmatpush1.msra.mxu0 0.0
  %564 = vmatprep.subr.mxu0 0.0
  %565 = vmatpush1.msra.mxu0 0.0
  %566 = vmatprep.subr.mxu0 0.0
  %567 = vmatpush1.msra.mxu0 0.0
  %568 = vmatprep.subr.mxu0 0.0
  %569 = vmatpush1.msra.mxu0 0.0
  %570 = vmatprep.subr.mxu0 0.0
  %571 = vmatpush1.msra.mxu0 0.0
  %572 = vmatprep.subr.mxu0 0.0
  %573 = vmatpush1.msra.mxu0 0.0
  %574 = vmatprep.subr.mxu0 0.0
  %575 = vmatpush1.msra.mxu0 0.0
  %576 = vmatprep.subr.mxu0 0.0
  %577 = vmatpush1.msra.mxu0 0.0
  %578 = vmatprep.subr.mxu0 0.0
  %579 = vmatpush1.msra.mxu0 0.0
  %580 = vmatprep.subr.mxu0 0.0
  %581 = vmatpush1.msra.mxu0 0.0
  %582 = vmatprep.subr.mxu0 0.0
  %583 = vmatpush1.msra.mxu0 0.0
  %584 = vmatprep.subr.mxu0 0.0
  %585 = vmatpush1.msra.mxu0 0.0
  %586 = vmatprep.subr.mxu0 0.0
  %587 = vmatpush1.msra.mxu0 0.0
  %588 = vmatprep.subr.mxu0 0.0
  %589 = vmatpush1.msra.mxu0 0.0
  %590 = vmatprep.mubr.f32.mxu0 0.0
  %591 = vmatmul.mubr.f32.gmra.mrb[0].mxu0 %v522
  %v592 = vpop.f32.mrb[0].mxu0
  %v593 = vadd.f32 0.0, %v592
  %v594 = vpop.f32.mrb[0].mxu0
  %595 = vmatprep.mubr.f32.mxu0 0.0
  %596 = vmatmul.mubr.f32.gmra.mrb[0].mxu0 %v524
  %v597 = vpop.f32.mrb[0].mxu0
  %v598 = vadd.f32 0.0, %v597
  %v599 = vpop.f32.mrb[0].mxu0
  %600 = vdwg.mxu0
  %v601 = vadd.f32 %v501, %v593
  %v602 = vadd.f32 %v506, %v598
  %v603 = vadd.f32 %v601, %v311
  %v604 = vadd.f32 %v602, %v311
  %v605 = vmax.f32 %v603, 0.0
  %v606 = vmax.f32 %v604, 0.0
  %s607 = scalar_lea.vmem %s3, 16
  %608 = vst [vmem:[%s607] sm:$0xff] %v605
  %609 = vst [vmem:[%s607 + $0x8] sm:$0xff] %v606
  // Predicated region
  $region14: #{dist_module_forward.1} parent=0 // pred_check
    _
  $region15: #{dist_module_forward.1} parent=0 // pred_check_branch
    %611 = sbr.rel (0) target = $region17
  $region16: #{dist_module_forward.1} parent=0 // pred_region
    _
  $region17: #{dist_module_forward.1} parent=0 // pred_fallthru
    _
  // Predicated region
  $region18: #{dist_module_forward.1} parent=0 // pred_check
    _
  $region19: #{dist_module_forward.1} parent=0 // pred_check_branch
    %613 = sbr.rel (0) target = $region21
  $region20: #{dist_module_forward.1} parent=0 // pred_region
    _
  $region21: #{dist_module_forward.1} parent=0 // pred_fallthru
    _

</llo_original>
